<compile_context>
chip_gen: v7x
topology: tpu7x:2x2x1
jax: 0.10.0
libtpu: 0.0.40
codegen_flags: <defaults>
</compile_context>

<pallas_src>
import functools

import jax
import jax.numpy as jnp
from jax.experimental import pallas as pl
from jax.experimental.pallas import tpu as pltpu

BN_EPS = 1e-5


def _stats_kernel(x_ref, w1_ref, b1_ref, gamma_ref, beta_ref, ss_ref, *,
                  rows, tile_rows, needs_mask):
    """Pass 1: accumulate global per-column sum / sum-of-squares of
    z = x @ w1 + b1, then fold into BN (scale, shift) on the last tile.

    ss_ref (2, H) is resident across the grid (constant output block index):
      row 0: running sum   -> scale      row 1: running sumsq -> shift
    """
    i = pl.program_id(0)

    @pl.when(i == 0)
    def _init():
        ss_ref[...] = jnp.zeros_like(ss_ref)

    z = jnp.dot(x_ref[...].astype(jnp.bfloat16), w1_ref[...],
                preferred_element_type=jnp.float32) + b1_ref[...]

    if needs_mask:
        # Mask rows past the true row count (ragged last tile) so they do not
        # pollute the batch statistics.
        row_ids = i * tile_rows + jax.lax.broadcasted_iota(
            jnp.int32, (tile_rows, 1), 0)
        z = jnp.where(row_ids < rows, z, 0.0)

    ss_ref[0:1, :] += jnp.sum(z, axis=0, keepdims=True)
    ss_ref[1:2, :] += jnp.sum(z * z, axis=0, keepdims=True)

    @pl.when(i == pl.num_programs(0) - 1)
    def _finalize():
        inv_n = 1.0 / rows
        mean = ss_ref[0:1, :] * inv_n
        # One-pass variance; clamp against catastrophic cancellation.
        var = jnp.maximum(ss_ref[1:2, :] * inv_n - mean * mean, 0.0)
        scale = gamma_ref[...] * jax.lax.rsqrt(var + BN_EPS)
        # Fold the Linear bias into the BN shift so pass 2 only needs
        # (x @ w1) * scale + shift.
        shift = beta_ref[...] + (b1_ref[...] - mean) * scale
        ss_ref[0:1, :] = scale
        ss_ref[1:2, :] = shift


def _apply_kernel(x_ref, w1_ref, ss_ref, w2_ref, b2_ref, o_ref):
    """Pass 2: y = relu((x@w1)*scale + shift) ; out = y . w2 + b2."""
    z = jnp.dot(x_ref[...].astype(jnp.bfloat16), w1_ref[...],
                preferred_element_type=jnp.float32)
    y = jnp.maximum(z * ss_ref[0:1, :] + ss_ref[1:2, :], 0.0)
    # Final Linear(H -> 1): broadcast-mul + lane reduce (XLU slot), no MXU pad.
    col = jnp.sum(y * w2_ref[...], axis=-1, keepdims=True) + b2_ref[0, 0]
    # Lane-dense (1, TR) row store instead of a lane-sparse (TR, 1) column.
    o_ref[...] = jnp.transpose(col).astype(o_ref.dtype)


def outlayer_forward(x, params, *, max_tile_rows=1024):
    """x: (B, N, in_num) float32 -> (B, N, 1) float32."""
    B, N, Din = x.shape
    H = params["w1"].shape[1]
    R = B * N

    # Row tile: full extent if it fits in one tile (no masking / padding),
    # otherwise a multiple-of-128 tile capped so double-buffered tiles fit
    # comfortably even inside v7x's smaller (64 MiB) VMEM.
    if R <= max_tile_rows:
        TR = R
    else:
        TR = max_tile_rows  # multiple of 128
    num_tiles = pl.cdiv(R, TR)
    needs_mask = (R % TR) != 0

    x2d = x.reshape(R, Din)  # stays f32 in HBM; cast to bf16 inside the kernel
    w1 = params["w1"].astype(jnp.bfloat16)  # tiny, VMEM-resident
    b1, gamma, beta = params["b1"], params["gamma"], params["beta"]
    w2, b2 = params["w2"], params["b2"]

    x_spec = pl.BlockSpec((TR, Din), lambda i: (i, 0))
    # Parameters stay resident: same block index on every grid step.
    w1_spec = pl.BlockSpec((Din, H), lambda i: (0, 0))
    vecH_spec = pl.BlockSpec((1, H), lambda i: (0, 0))
    ss_spec = pl.BlockSpec((2, H), lambda i: (0, 0))

    vmem_limit = 32 * 1024 * 1024

    # ---- pass 1: global BN statistics -> folded (scale, shift) ----
    ss = pl.pallas_call(
        functools.partial(_stats_kernel, rows=R, tile_rows=TR,
                          needs_mask=needs_mask),
        out_shape=jax.ShapeDtypeStruct((2, H), jnp.float32),
        grid=(num_tiles,),
        in_specs=[x_spec, w1_spec, vecH_spec, vecH_spec, vecH_spec],
        out_specs=ss_spec,
        compiler_params=pltpu.CompilerParams(
            dimension_semantics=("arbitrary",),
            vmem_limit_bytes=vmem_limit),
        cost_estimate=pl.CostEstimate(
            flops=2 * num_tiles * TR * Din * H + 6 * num_tiles * TR * H,
            transcendentals=H,
            bytes_accessed=R * Din * 4 + Din * H * 2 + 6 * H * 4),
    )(x2d, w1, b1, gamma, beta)

    # ---- pass 2: normalize + ReLU + Linear(H -> 1), lane-dense output ----
    out_rows = pl.pallas_call(
        _apply_kernel,
        out_shape=jax.ShapeDtypeStruct((num_tiles, TR), jnp.float32),
        grid=(num_tiles,),
        in_specs=[
            x_spec, w1_spec, ss_spec, vecH_spec,
            pl.BlockSpec(memory_space=pltpu.MemorySpace.SMEM),  # b2 scalar
        ],
        out_specs=pl.BlockSpec((1, TR), lambda i: (i, 0)),
        compiler_params=pltpu.CompilerParams(
            dimension_semantics=("parallel",),
            vmem_limit_bytes=vmem_limit),
        cost_estimate=pl.CostEstimate(
            flops=2 * num_tiles * TR * Din * H + 5 * num_tiles * TR * H,
            transcendentals=0,
            bytes_accessed=R * Din * 4 + Din * H * 2 + 3 * H * 4 + R * 4),
    )(x2d, w1, ss, w2, b2)

    return out_rows.reshape(num_tiles * TR)[:R].reshape(B, N, 1)


def init_params(key, in_num, inter_num):
    """Deterministic synthetic parameters (PyTorch-Linear-like uniform init)."""
    k1, k2, k3, k4 = jax.random.split(key, 4)
    bound1 = 1.0 / jnp.sqrt(in_num)
    bound2 = 1.0 / jnp.sqrt(inter_num)
    return {
        # stored as (Din, H) so the kernel can do x @ w1 directly
        "w1": jax.random.uniform(k1, (in_num, inter_num), jnp.float32,
                                 -bound1, bound1),
        "b1": jax.random.uniform(k2, (1, inter_num), jnp.float32,
                                 -bound1, bound1),
        "gamma": jnp.ones((1, inter_num), jnp.float32),
        "beta": jnp.zeros((1, inter_num), jnp.float32),
        "w2": jax.random.uniform(k3, (1, inter_num), jnp.float32,
                                 -bound2, bound2),
        "b2": jax.random.uniform(k4, (1, 1), jnp.float32, -bound2, bound2),
    }


def reference_forward(x, params):
    """Pure-JAX reference of the PyTorch forward (layer_num=2, train-mode BN).

    Uses the same bf16-rounded x / w1 as the kernel path (math in f32).
    """
    B, N, Din = x.shape
    x2d = x.reshape(B * N, Din).astype(jnp.bfloat16).astype(jnp.float32)
    w1 = params["w1"].astype(jnp.bfloat16).astype(jnp.float32)
    z = x2d @ w1 + params["b1"]
    mean = jnp.mean(z, axis=0, keepdims=True)
    var = jnp.mean((z - mean) ** 2, axis=0, keepdims=True)
    z = (z - mean) / jnp.sqrt(var + BN_EPS)
    z = z * params["gamma"] + params["beta"]
    z = jnp.maximum(z, 0.0)
    out = jnp.sum(z * params["w2"], axis=-1, keepdims=True) + params["b2"]
    return out.reshape(B, N, 1)


if __name__ == "__main__":
    # OutLayer(in_num=32, layer_num=2, inter_num=64)
    B, N, IN_NUM, INTER = 2, 8, 32, 64

    key = jax.random.PRNGKey(0)
    kx, kp = jax.random.split(key)
    x = jax.random.normal(kx, (B, N, IN_NUM), jnp.float32)
    params = init_params(kp, IN_NUM, INTER)

    out = jax.block_until_ready(outlayer_forward(x, params))
    ref = reference_forward(x, params)

    assert out.shape == (B, N, 1), out.shape
    assert jnp.allclose(out, ref, atol=2e-3, rtol=2e-3), (
        float(jnp.max(jnp.abs(out - ref))))
    print("KERNEL_OK")
</pallas_src>

<mosaic_0001>
module attributes {stable_mosaic.version = 11 : i64} {
  func.func @_stats_kernel(%arg0: i32, %arg1: memref<16x32xf32, #tpu.memory_space<vmem>>, %arg2: memref<32x64xbf16, #tpu.memory_space<vmem>>, %arg3: memref<1x64xf32, #tpu.memory_space<vmem>>, %arg4: memref<1x64xf32, #tpu.memory_space<vmem>>, %arg5: memref<1x64xf32, #tpu.memory_space<vmem>>, %arg6: memref<2x64xf32, #tpu.memory_space<vmem>>) attributes {dimension_semantics = [#tpu.dimension_semantics<arbitrary>], iteration_bounds = array<i64: 1>, scalar_prefetch = 0 : i64, scratch_operands = 0 : i64, tpu.core_type = #tpu.core_type<tc>, window_params = [{transform_indices = @transform_0, window_bounds = array<i64: 16, 32>}, {pipeline_mode = #tpu.pipeline_mode<synchronous>, transform_indices = @transform_1, window_bounds = array<i64: 32, 64>}, {pipeline_mode = #tpu.pipeline_mode<synchronous>, transform_indices = @transform_2, window_bounds = array<i64: 1, 64>}, {pipeline_mode = #tpu.pipeline_mode<synchronous>, transform_indices = @transform_3, window_bounds = array<i64: 1, 64>}, {pipeline_mode = #tpu.pipeline_mode<synchronous>, transform_indices = @transform_4, window_bounds = array<i64: 1, 64>}, {pipeline_mode = #tpu.pipeline_mode<synchronous>, transform_indices = @transform_5, window_bounds = array<i64: 2, 64>}]} {
    %c0_i32 = arith.constant 0 : i32
    %0 = arith.cmpi eq, %arg0, %c0_i32 : i32
    %1 = arith.extui %0 : i1 to i32
    %c0_i32_0 = arith.constant 0 : i32
    %2 = arith.cmpi ne, %1, %c0_i32_0 : i32
    scf.if %2 {
      %cst_17 = arith.constant 0.000000e+00 : f32
      %24 = vector.broadcast %cst_17 : f32 to vector<2x64xf32>
      %c0_18 = arith.constant 0 : index
      %c0_19 = arith.constant 0 : index
      %25 = vector.load %arg6[%c0_18, %c0_19] : memref<2x64xf32, #tpu.memory_space<vmem>>, vector<2x64xf32>
      tpu.vector_store %arg6[%c0_18, %c0_19], %24 {strides = array<i32>} : memref<2x64xf32, #tpu.memory_space<vmem>>, vector<2x64xf32>,
    } else {
    }
    %c0 = arith.constant 0 : index
    %c0_1 = arith.constant 0 : index
    %3 = vector.load %arg1[%c0, %c0_1] : memref<16x32xf32, #tpu.memory_space<vmem>>, vector<16x32xf32>
    %4 = arith.truncf %3 : vector<16x32xf32> to vector<16x32xbf16>
    %c0_2 = arith.constant 0 : index
    %c0_3 = arith.constant 0 : index
    %5 = vector.load %arg2[%c0_2, %c0_3] : memref<32x64xbf16, #tpu.memory_space<vmem>>, vector<32x64xbf16>
    %cst = arith.constant dense<0.000000e+00> : vector<16x64xf32>
    %6 = tpu.matmul %4, %5, %cst {dimension_numbers = #tpu.dot_dimension_numbers<[1], [0], [0], [1], [0, 0, 1, 1], [], []>} : vector<16x32xbf16>, vector<32x64xbf16>, vector<16x64xf32> -> vector<16x64xf32>
    %c0_4 = arith.constant 0 : index
    %c0_5 = arith.constant 0 : index
    %7 = vector.load %arg3[%c0_4, %c0_5] : memref<1x64xf32, #tpu.memory_space<vmem>>, vector<1x64xf32>
    %8 = vector.broadcast %7 : vector<1x64xf32> to vector<16x64xf32>
    %9 = arith.addf %6, %8 : vector<16x64xf32>
    %c0_6 = arith.constant 0 : index
    %c0_7 = arith.constant 0 : index
    %10 = vector.load %arg6[%c0_6, %c0_7] : memref<2x64xf32, #tpu.memory_space<vmem>>, vector<1x64xf32>
    %cst_8 = arith.constant dense<0.000000e+00> : vector<64xf32>
    %11 = vector.multi_reduction <add>, %9, %cst_8 [0] : vector<16x64xf32> to vector<64xf32>
    %12 = vector.shape_cast %11 : vector<64xf32> to vector<1x64xf32>
    %13 = arith.addf %10, %12 : vector<1x64xf32>
    %c0_9 = arith.constant 0 : index
    %c0_10 = arith.constant 0 : index
    %14 = vector.load %arg6[%c0_9, %c0_10] : memref<2x64xf32, #tpu.memory_space<vmem>>, vector<1x64xf32>
    tpu.vector_store %arg6[%c0_9, %c0_10], %13 {strides = array<i32>} : memref<2x64xf32, #tpu.memory_space<vmem>>, vector<1x64xf32>,
    %c1 = arith.constant 1 : index
    %c0_11 = arith.constant 0 : index
    %15 = vector.load %arg6[%c1, %c0_11] : memref<2x64xf32, #tpu.memory_space<vmem>>, vector<1x64xf32>
    %16 = arith.mulf %9, %9 : vector<16x64xf32>
    %cst_12 = arith.constant dense<0.000000e+00> : vector<64xf32>
    %17 = vector.multi_reduction <add>, %16, %cst_12 [0] : vector<16x64xf32> to vector<64xf32>
    %18 = vector.shape_cast %17 : vector<64xf32> to vector<1x64xf32>
    %19 = arith.addf %15, %18 : vector<1x64xf32>
    %c1_13 = arith.constant 1 : index
    %c0_14 = arith.constant 0 : index
    %20 = vector.load %arg6[%c1_13, %c0_14] : memref<2x64xf32, #tpu.memory_space<vmem>>, vector<1x64xf32>
    tpu.vector_store %arg6[%c1_13, %c0_14], %19 {strides = array<i32>} : memref<2x64xf32, #tpu.memory_space<vmem>>, vector<1x64xf32>,
    %c0_i32_15 = arith.constant 0 : i32
    %21 = arith.cmpi eq, %arg0, %c0_i32_15 : i32
    %22 = arith.extui %21 : i1 to i32
    %c0_i32_16 = arith.constant 0 : i32
    %23 = arith.cmpi ne, %22, %c0_i32_16 : i32
    scf.if %23 {
      %c0_17 = arith.constant 0 : index
      %c0_18 = arith.constant 0 : index
      %24 = vector.load %arg6[%c0_17, %c0_18] : memref<2x64xf32, #tpu.memory_space<vmem>>, vector<1x64xf32>
      %cst_19 = arith.constant 6.250000e-02 : f32
      %25 = vector.broadcast %cst_19 : f32 to vector<1x64xf32>
      %26 = arith.mulf %24, %25 : vector<1x64xf32>
      %c1_20 = arith.constant 1 : index
      %c0_21 = arith.constant 0 : index
      %27 = vector.load %arg6[%c1_20, %c0_21] : memref<2x64xf32, #tpu.memory_space<vmem>>, vector<1x64xf32>
      %cst_22 = arith.constant 6.250000e-02 : f32
      %28 = vector.broadcast %cst_22 : f32 to vector<1x64xf32>
      %29 = arith.mulf %27, %28 : vector<1x64xf32>
      %30 = arith.mulf %26, %26 : vector<1x64xf32>
      %31 = arith.subf %29, %30 : vector<1x64xf32>
      %cst_23 = arith.constant 0.000000e+00 : f32
      %32 = vector.broadcast %cst_23 : f32 to vector<1x64xf32>
      %33 = arith.maximumf %31, %32 : vector<1x64xf32>
      %c0_24 = arith.constant 0 : index
      %c0_25 = arith.constant 0 : index
      %34 = vector.load %arg4[%c0_24, %c0_25] : memref<1x64xf32, #tpu.memory_space<vmem>>, vector<1x64xf32>
      %cst_26 = arith.constant 9.99999974E-6 : f32
      %35 = vector.broadcast %cst_26 : f32 to vector<1x64xf32>
      %36 = arith.addf %33, %35 : vector<1x64xf32>
      %37 = math.rsqrt %36 : vector<1x64xf32>
      %38 = arith.mulf %34, %37 : vector<1x64xf32>
      %c0_27 = arith.constant 0 : index
      %c0_28 = arith.constant 0 : index
      %39 = vector.load %arg5[%c0_27, %c0_28] : memref<1x64xf32, #tpu.memory_space<vmem>>, vector<1x64xf32>
      %c0_29 = arith.constant 0 : index
      %c0_30 = arith.constant 0 : index
      %40 = vector.load %arg3[%c0_29, %c0_30] : memref<1x64xf32, #tpu.memory_space<vmem>>, vector<1x64xf32>
      %41 = arith.subf %40, %26 : vector<1x64xf32>
      %42 = arith.mulf %41, %38 : vector<1x64xf32>
      %43 = arith.addf %39, %42 : vector<1x64xf32>
      %c0_31 = arith.constant 0 : index
      %c0_32 = arith.constant 0 : index
      %44 = vector.load %arg6[%c0_31, %c0_32] : memref<2x64xf32, #tpu.memory_space<vmem>>, vector<1x64xf32>
      tpu.vector_store %arg6[%c0_31, %c0_32], %38 {strides = array<i32>} : memref<2x64xf32, #tpu.memory_space<vmem>>, vector<1x64xf32>,
      %c1_33 = arith.constant 1 : index
      %c0_34 = arith.constant 0 : index
      %45 = vector.load %arg6[%c1_33, %c0_34] : memref<2x64xf32, #tpu.memory_space<vmem>>, vector<1x64xf32>
      tpu.vector_store %arg6[%c1_33, %c0_34], %43 {strides = array<i32>} : memref<2x64xf32, #tpu.memory_space<vmem>>, vector<1x64xf32>,
    } else {
    }
    return
  }
  func.func @transform_0(%arg0: i32) -> (i32, i32) {
    %c0_i32 = arith.constant 0 : i32
    %c0_i32_0 = arith.constant 0 : i32
    return %arg0, %c0_i32 : i32, i32
  }
  func.func @transform_1(%arg0: i32) -> (i32, i32) {
    %c0_i32 = arith.constant 0 : i32
    %c0_i32_0 = arith.constant 0 : i32
    %c0_i32_1 = arith.constant 0 : i32
    return %c0_i32, %c0_i32_0 : i32, i32
  }
  func.func @transform_2(%arg0: i32) -> (i32, i32) {
    %c0_i32 = arith.constant 0 : i32
    %c0_i32_0 = arith.constant 0 : i32
    %c0_i32_1 = arith.constant 0 : i32
    return %c0_i32, %c0_i32_0 : i32, i32
  }
  func.func @transform_3(%arg0: i32) -> (i32, i32) {
    %c0_i32 = arith.constant 0 : i32
    %c0_i32_0 = arith.constant 0 : i32
    %c0_i32_1 = arith.constant 0 : i32
    return %c0_i32, %c0_i32_0 : i32, i32
  }
  func.func @transform_4(%arg0: i32) -> (i32, i32) {
    %c0_i32 = arith.constant 0 : i32
    %c0_i32_0 = arith.constant 0 : i32
    %c0_i32_1 = arith.constant 0 : i32
    return %c0_i32, %c0_i32_0 : i32, i32
  }
  func.func @transform_5(%arg0: i32) -> (i32, i32) {
    %c0_i32 = arith.constant 0 : i32
    %c0_i32_0 = arith.constant 0 : i32
    %c0_i32_1 = arith.constant 0 : i32
    return %c0_i32, %c0_i32_0 : i32, i32
  }
}

</mosaic_0001>

<llo_original>
// kernel: tpu_custom_call.1
$region0: #{tpu_custom_call.1}
  #allocation0 [shape = 'u32[]', space=smem, size = 0x4, offset = 0x4, fixed_abs, tag = 'smem constant byte address 0x4 - core index']
  #allocation1 [shape = 'u32[144,128]{1,0:T(1,128)}', space=vmem, size = 0x12000, scoped, tag = 'internal scratch']
  %s0 = inlined_call_operand.hbm [shape: f32[16,32], index: 0, kind: input, shape index: {}]
  %s1 = inlined_call_operand.hbm [shape: bf16[32,64], index: 1, kind: input, shape index: {}]
  %s2 = inlined_call_operand.vmem [shape: f32[1,64], index: 2, kind: input, shape index: {}]
  %s3 = inlined_call_operand.vmem [shape: f32[1,64], index: 3, kind: input, shape index: {}]
  %s4 = inlined_call_operand.vmem [shape: f32[1,64], index: 4, kind: input, shape index: {}]
  %s5 = inlined_call_operand.hbm [shape: f32[2,64], index: 5, kind: output, shape index: {}]
  %s6 = sld [smem:[#allocation0]]
  $region46: #{tpu_custom_call.1} parent=0
    _
  %s8 = ssub.s32 1, %s6
  %s9 = scalar_select 0, %s8, %s6
  $region1: #{tpu_custom_call.1} parent=0
    #allocation2 [shape = 'u8[8192]{0}', space=vmem, size = 0x2000, scoped, tag = 'input window, operand 0, single buffered']
    #allocation3 [shape = 's32[1]{0}', space=sflag, size = 0x4, scoped, tag = 'scoped memory for tpu_custom_call.1']
    #allocation4 [shape = 's32[1]{0}', space=sflag, size = 0x4, scoped, tag = 'scoped memory for tpu_custom_call.1']
    #allocation5 [shape = 'u8[8192]{0}', space=vmem, size = 0x2000, scoped, tag = 'input window, operand 1, single buffered']
    #allocation6 [shape = 's32[1]{0}', space=sflag, size = 0x4, scoped, tag = 'scoped memory for tpu_custom_call.1']
    #allocation7 [shape = 'u8[1024]{0}', space=vmem, size = 0x400, scoped, tag = 'output window, operand 0, single buffered']
    %10 = vsyncpa [#allocation3], 0
    %11 = vsyncpa [#allocation6], 0
    %12 = vsyncpa [#allocation4], 0
    // Predicated region
    $region2: #{tpu_custom_call.1} parent=1 // pred_check
      _
    $region3: #{tpu_custom_call.1} parent=1 // pred_check_branch
      %14 = sbr.rel (0) target = $region5
    $region4: #{tpu_custom_call.1} parent=1 // pred_region
      %s16 = ssub.s32 256, 256
      %17 = vsyncadd [#allocation3], %s16
      %s18 = sshll.u32 [#allocation2], 4
      %s19 = int_to_ptr.vmem [resolvable:$true] %s18
      %24 = dma.hbm_to_vmem [thread:$0]  %s0, 256, %s19, [#allocation3], 128, 128, 8
    $region5: #{tpu_custom_call.1} parent=1 // pred_fallthru
      _
    // Predicated region
    $region6: #{tpu_custom_call.1} parent=1 // pred_check
      _
    $region7: #{tpu_custom_call.1} parent=1 // pred_check_branch
      %26 = sbr.rel (0) target = $region9
    $region8: #{tpu_custom_call.1} parent=1 // pred_region
      %s28 = ssub.s32 256, 256
      %29 = vsyncadd [#allocation6], %s28
      %s30 = sshll.u32 [#allocation5], 4
      %s31 = int_to_ptr.vmem [resolvable:$true] %s30
      %36 = dma.hbm_to_vmem [thread:$0]  %s1, 256, %s31, [#allocation6], 64, 64, 4
    $region9: #{tpu_custom_call.1} parent=1 // pred_fallthru
      _
    // Predicated region
    $region10: #{tpu_custom_call.1} parent=1 // pred_check
      _
    $region11: #{tpu_custom_call.1} parent=1 // pred_check_branch
      %38 = sbr.rel (0) target = $region13
    $region12: #{tpu_custom_call.1} parent=1 // pred_region
      _
    $region13: #{tpu_custom_call.1} parent=1 // pred_fallthru
      _
    // Predicated region
    $region14: #{tpu_custom_call.1} parent=1 // pred_check
      _
    $region15: #{tpu_custom_call.1} parent=1 // pred_check_branch
      %40 = sbr.rel (0) target = $region17
    $region16: #{tpu_custom_call.1} parent=1 // pred_region
      _
    $region17: #{tpu_custom_call.1} parent=1 // pred_fallthru
      _
    // Predicated region
    $region18: #{tpu_custom_call.1} parent=1 // pred_check
      _
    $region19: #{tpu_custom_call.1} parent=1 // pred_check_branch
      %42 = sbr.rel (0) target = $region21
    $region20: #{tpu_custom_call.1} parent=1 // pred_region
      _
    $region21: #{tpu_custom_call.1} parent=1 // pred_fallthru
      _
    // Predicated region
    $region22: #{tpu_custom_call.1} parent=1 // pred_check
      _
    $region23: #{tpu_custom_call.1} parent=1 // pred_check_branch
      %44 = sbr.rel (0) target = $region25
    $region24: #{tpu_custom_call.1} parent=1 // pred_region
      %45 = dma.done [#allocation3], 256
    $region25: #{tpu_custom_call.1} parent=1 // pred_fallthru
      _
    // Predicated region
    $region26: #{tpu_custom_call.1} parent=1 // pred_check
      _
    $region27: #{tpu_custom_call.1} parent=1 // pred_check_branch
      %47 = sbr.rel (0) target = $region29
    $region28: #{tpu_custom_call.1} parent=1 // pred_region
      %48 = dma.done [#allocation6], 256
    $region29: #{tpu_custom_call.1} parent=1 // pred_fallthru
      _
    %p50 = scmp.eq.s32.totalorder 0, 0
    // Predicated region
    $region30: #{tpu_custom_call.1} parent=1 // pred_check
      %p51 = pneg %p50
    $region31: #{tpu_custom_call.1} parent=1 // pred_check_branch
      %53 = sbr.rel (%p51) target = $region33
    $region32: #{tpu_custom_call.1} parent=1 // pred_region
      %vm54 = vcmask 517120
      %55 = vst.msk [vmem:[#allocation7] sm:$0x3] %vm54, 0.0
    $region33: #{tpu_custom_call.1} parent=1 // pred_fallthru
      _
    %v56 = vld [vmem:[#allocation2] sm:$0xff]
    %v57 = vld [vmem:[#allocation2 + $0x8] sm:$0xff]
    %v58 = vpack.c.bf16 %v57, %v56
    %v59 = vld [vmem:[#allocation5] sm:$0xf]
    %v60 = vld [vmem:[#allocation5 + $0x4] sm:$0xf]
    %v61 = vld [vmem:[#allocation5 + $0x8] sm:$0xf]
    %v62 = vld [vmem:[#allocation5 + $0xc] sm:$0xf]
    %v63 = vld [vmem:[%s2] sm:$0x1]
    %v65 = vlaneseq
    %v66 = vshrl.u32 %v65, 7
    %v67 = vsub.s32 0, %v66
    %v68 = vrot.slane %v63, %v67
    %v74 = vunpack.c.l.b16 %v59
    %v75 = vunpack.c.l.b16 %v60
    %v76 = vunpack.c.l.b16 %v61
    %v77 = vunpack.c.l.b16 %v62
    %v78 = vpack.c.b16 %v75, %v74
    %v79 = vpack.c.b16 %v77, %v76
    %vm82 = vcmask 261120
    %v84 = vsel %vm82, %v58, 0
    %86 = vmatprep.subr.bf16.mxu0 0
    %87 = vmatpush1.bf16.msra.mxu0 %v78
    %88 = vmatprep.subr.bf16.mxu0 0
    %89 = vmatpush1.bf16.msra.mxu0 %v79
    %90 = vmatprep.subr.bf16.mxu0 0
    %91 = vmatpush1.bf16.msra.mxu0 0
    %92 = vmatprep.subr.bf16.mxu0 0
    %93 = vmatpush1.bf16.msra.mxu0 0
    %94 = vmatprep.subr.bf16.mxu0 0
    %95 = vmatpush1.bf16.msra.mxu0 0
    %96 = vmatprep.subr.bf16.mxu0 0
    %97 = vmatpush1.bf16.msra.mxu0 0
    %98 = vmatprep.subr.bf16.mxu0 0
    %99 = vmatpush1.bf16.msra.mxu0 0
    %100 = vmatprep.subr.bf16.mxu0 0
    %101 = vmatpush1.bf16.msra.mxu0 0
    %102 = vmatprep.subr.bf16.mxu0 0
    %103 = vmatpush1.bf16.msra.mxu0 0
    %104 = vmatprep.subr.bf16.mxu0 0
    %105 = vmatpush1.bf16.msra.mxu0 0
    %106 = vmatprep.subr.bf16.mxu0 0
    %107 = vmatpush1.bf16.msra.mxu0 0
    %108 = vmatprep.subr.bf16.mxu0 0
    %109 = vmatpush1.bf16.msra.mxu0 0
    %110 = vmatprep.subr.bf16.mxu0 0
    %111 = vmatpush1.bf16.msra.mxu0 0
    %112 = vmatprep.subr.bf16.mxu0 0
    %113 = vmatpush1.bf16.msra.mxu0 0
    %114 = vmatprep.subr.bf16.mxu0 0
    %115 = vmatpush1.bf16.msra.mxu0 0
    %116 = vmatprep.subr.bf16.mxu0 0
    %117 = vmatpush1.bf16.msra.mxu0 0
    %118 = vmatprep.mubr.bf16.mxu0 0
    %119 = vmatmul.mubr.bf16.gmra.mrb[0].mxu0 %v84
    %v120 = vpop.f32.mrb[0].mxu0
    %v121 = vadd.f32 %v68, %v120
    %v122 = vpop.f32.mrb[0].mxu0
    %v123 = vpop.f32.mrb[0].mxu0
    %v124 = vadd.f32 %v68, %v123
    %v125 = vpop.f32.mrb[0].mxu0
    %126 = vdwg.mxu0
    %v127 = vld [vmem:[#allocation7] sm:$0x1]
    %vm128 = vcmask 523264
    %v129 = vsel %vm128, %v121, 0.0
    %v130 = vsel %vm128, %v124, 0.0
    %v131 = vadd.f32 %v129, %v130
    %v132 = vrot.slane %v131, 4
    %v133 = vadd.f32 %v131, %v132
    %v134 = vrot.slane %v133, 2
    %v135 = vadd.f32 %v133, %v134
    %v136 = vrot.slane %v135, 1
    %v137 = vadd.f32 %v135, %v136
    %v138 = vadd.f32 %v127, %v137
    %vm139 = vcmask 516096
    %140 = vst.msk [vmem:[#allocation7] sm:$0x1] %vm139, %v138
    %v141 = vld [vmem:[#allocation7 + $0x1] sm:$0x1]
    %v142 = vmul.f32 %v121, %v121
    %v143 = vmul.f32 %v124, %v124
    %v144 = vsel %vm128, %v142, 0.0
    %v145 = vsel %vm128, %v143, 0.0
    %v146 = vadd.f32 %v144, %v145
    %v147 = vrot.slane %v146, 4
    %v148 = vadd.f32 %v146, %v147
    %v149 = vrot.slane %v148, 2
    %v150 = vadd.f32 %v148, %v149
    %v151 = vrot.slane %v150, 1
    %v152 = vadd.f32 %v150, %v151
    %v153 = vadd.f32 %v141, %v152
    %154 = vst.msk [vmem:[#allocation7 + $0x1] sm:$0x1] %vm139, %v153
    // Predicated region
    $region34: #{tpu_custom_call.1} parent=1 // pred_check
      %p155 = pneg %p50
    $region35: #{tpu_custom_call.1} parent=1 // pred_check_branch
      %157 = sbr.rel (%p155) target = $region37
    $region36: #{tpu_custom_call.1} parent=1 // pred_region
      %v158 = vld [vmem:[#allocation7] sm:$0x1]
      %v159 = vmul.f32 %v158, 0.0625
      %v160 = vld [vmem:[#allocation7 + $0x1] sm:$0x1]
      %v161 = vmul.f32 %v160, 0.0625
      %v162 = vmul.f32 %v159, %v159
      %v163 = vsub.f32 %v161, %v162
      %v164 = vmax.f32 %v163, 0.0
      %v165 = vld [vmem:[%s3] sm:$0x1]
      %v166 = vadd.f32 %v164, 1e-05
      %v167 = vrsqrt.pop %v166
      %v168 = vmul.f32 %v165, %v167
      %v169 = vld [vmem:[%s4] sm:$0x1]
      %v170 = vld [vmem:[%s2] sm:$0x1]
      %v171 = vsub.f32 %v170, %v159
      %v172 = vmul.f32 %v171, %v168
      %v173 = vadd.f32 %v169, %v172
      %174 = vst.msk [vmem:[#allocation7] sm:$0x1] %vm139, %v168
      %175 = vst.msk [vmem:[#allocation7 + $0x1] sm:$0x1] %vm139, %v173
    $region37: #{tpu_custom_call.1} parent=1 // pred_fallthru
      _
    // Predicated region
    $region38: #{tpu_custom_call.1} parent=1 // pred_check
      _
    $region39: #{tpu_custom_call.1} parent=1 // pred_check_branch
      %177 = sbr.rel (0) target = $region41
    $region40: #{tpu_custom_call.1} parent=1 // pred_region
      %s179 = ssub.s32 32, 32
      %180 = vsyncadd [#allocation4], %s179
      %s182 = sshll.u32 [#allocation7], 4
      %s183 = int_to_ptr.vmem [resolvable:$true] %s182
      %185 = dma.vmem_to_hbm [thread:$0]  %s183, 32, %s5, [#allocation4]
    $region41: #{tpu_custom_call.1} parent=1 // pred_fallthru
      _
    // Predicated region
    $region42: #{tpu_custom_call.1} parent=1 // pred_check
      _
    $region43: #{tpu_custom_call.1} parent=1 // pred_check_branch
      %187 = sbr.rel (0) target = $region45
    $region44: #{tpu_custom_call.1} parent=1 // pred_region
      %188 = dma.done [#allocation4], 32
    $region45: #{tpu_custom_call.1} parent=1 // pred_fallthru
      _
    %189 = vsyncpa [#allocation3], 1
    %190 = vsyncpa [#allocation6], 1
    %191 = vsyncpa [#allocation4], 1

</llo_original>
